<compile_context>
chip_gen: v5e
topology: v5e:2x2
jax: 0.10.0
libtpu: 0.0.40
codegen_flags: <defaults>
</compile_context>

<pallas_src>
import functools

import jax
import jax.numpy as jnp
import numpy as np
from jax.experimental import pallas as pl
from jax.experimental.pallas import tpu as pltpu

HIDDEN = 512
BATCH_TILE = 512             # roofline sweet spot (512-1024); multiple of 256/128
SINGLE_TILE_MAX_BATCH = 128  # at/below this: one grid step (launch-latency bound)


def _round_up(n, m):
    return -(-n // m) * m


def _value_net_kernel(x_ref, w1_ref, b1_ref, w2_ref, b2_ref, o_ref, acc_ref,
                      *, mxu_dtype, d_rem):
    """One (batch-tile, K-tile) grid step of relu(x @ W1 + b1) . w2 + b2."""
    k = pl.program_id(1)
    nk = pl.num_programs(1)

    @pl.when(k == 0)
    def _init():
        acc_ref[...] = jnp.zeros_like(acc_ref)

    xv = x_ref[...]
    wv = w1_ref[...]

    if d_rem:
        # Ragged final K tile: zero the out-of-range columns of x AND rows of
        # w1 so unspecified padding (possibly NaN/Inf) cannot reach the
        # reduction as 0 * NaN.
        tk = xv.shape[-1]
        limit = jnp.where(k == nk - 1, d_rem, tk)
        col = jax.lax.broadcasted_iota(jnp.int32, xv.shape, dimension=1)
        xv = jnp.where(col < limit, xv, 0)
        row = jax.lax.broadcasted_iota(jnp.int32, wv.shape, dimension=0)
        wv = jnp.where(row < limit, wv, 0)

    if mxu_dtype is not None:
        # In-kernel cast: bf16 MXU rate with no extra HBM pass over x.
        xv = xv.astype(mxu_dtype)
        wv = wv.astype(mxu_dtype)

    # fc1 partial product on the MXU, f32 accumulation in VMEM scratch.
    acc_ref[...] += jnp.dot(xv, wv, preferred_element_type=jnp.float32)

    @pl.when(k == nk - 1)
    def _finalize():
        # Bias + ReLU on the VPU in f32.
        h = jnp.maximum(acc_ref[...] + b1_ref[...], 0.0)
        # fc2 as a VPU multiply + lane reduction (w2 is a (1, 512) row); the
        # MXU would waste a full push/pop on a single output column.
        v = jnp.sum(h * w2_ref[...], axis=-1, keepdims=True)      # (TB, 1) f32
        o_ref[...] = (v + b2_ref[0, 0]).astype(o_ref.dtype)       # b2: SMEM scalar


def _vmem_budget_bytes():
    # Per-generation budget: ~5/8 of physical VMEM (64 MiB on v7x, 128 MiB on
    # v5e/v6e), falling back to the v7x-safe 64 MiB if the query is unavailable.
    try:
        cap = int(pltpu.get_tpu_info().vmem_capacity_bytes)
    except Exception:
        cap = 64 << 20
    return (cap * 5) // 8


def _vmem_bytes(tb, tk, x_itemsize, w1_itemsize):
    x_buf = 2 * tb * tk * x_itemsize          # double-buffered x tile
    w1_buf = 2 * tk * HIDDEN * w1_itemsize    # conservatively double-buffered
    acc = tb * HIDDEN * 4                     # f32 accumulator scratch
    out = 2 * tb * 4                          # (TB, 1) output blocks
    vecs = 2 * 2 * HIDDEN * 4                 # b1, w2 row vectors
    return x_buf + w1_buf + acc + out + vecs


def _choose_batch_tile(B):
    if B <= SINGLE_TILE_MAX_BATCH:
        return B                              # one step; nothing to pipeline/split
    # >= 2 balanced grid steps so both v7x TensorCores get work; cap at the
    # roofline-friendly BATCH_TILE; keep the sublane dim a multiple of 8.
    return min(BATCH_TILE, _round_up(-(-B // 2), 8))


def value_network_forward(x, w1, b1, w2, b2, *, mxu_dtype=None, k_tile=None):
    """Forward pass of ValueNetwork: relu(x @ w1 + b1) . w2 + b2 -> (B, 1) f32.

    x:  (B, D)     activations (f32 or bf16; bf16 is consumed directly)
    w1: (D, 512)   fc1 weight (transposed vs torch's (512, D))
    b1: (1, 512)   fc1 bias
    w2: (1, 512)   fc2 weight row (same layout as torch fc2.weight)
    b2: (1, 1)     fc2 bias
    mxu_dtype: optional dtype the fc1 MXU operands are cast to *inside* the
      kernel (e.g. jnp.bfloat16); bias/ReLU/fc2 epilogue always runs in f32.
    k_tile: optional override of the K (input_dim) tile, mainly for tests.
    """
    B, D = x.shape
    assert w1.shape == (D, HIDDEN) and b1.shape == (1, HIDDEN)
    assert w2.shape == (1, HIDDEN) and b2.shape == (1, 1)

    tb = _choose_batch_tile(B)

    budget = _vmem_budget_bytes()
    x_sz, w1_sz = x.dtype.itemsize, w1.dtype.itemsize
    if k_tile is not None:
        tk = min(int(k_tile), D)
    elif _vmem_bytes(tb, D, x_sz, w1_sz) <= budget:
        tk = D                                 # whole reduction in one K step
    else:
        tk = 128                               # lane-aligned K tiles when streaming
        while tk * 2 < D and _vmem_bytes(tb, tk * 2, x_sz, w1_sz) <= budget:
            tk *= 2

    nb = pl.cdiv(B, tb)
    nk = pl.cdiv(D, tk)
    d_rem = D % tk                             # 0 when tk == D (no K raggedness)

    vmem_limit = int(min(budget + (4 << 20),
                         max(2 * _vmem_bytes(tb, tk, x_sz, w1_sz), 16 << 20)))

    kernel = functools.partial(_value_net_kernel, mxu_dtype=mxu_dtype, d_rem=d_rem)

    out = pl.pallas_call(
        kernel,
        out_shape=jax.ShapeDtypeStruct((B, 1), jnp.float32),
        grid_spec=pltpu.PrefetchScalarGridSpec(
            num_scalar_prefetch=0,
            grid=(nb, nk),
            in_specs=[
                pl.BlockSpec((tb, tk), lambda i, k: (i, k)),          # x: streamed
                pl.BlockSpec((tk, HIDDEN), lambda i, k: (k, 0)),      # w1
                pl.BlockSpec((1, HIDDEN), lambda i, k: (0, 0)),       # b1: resident
                pl.BlockSpec((1, HIDDEN), lambda i, k: (0, 0)),       # w2: resident
                pl.BlockSpec(memory_space=pltpu.MemorySpace.SMEM),    # b2: SMEM scalar
            ],
            out_specs=pl.BlockSpec((tb, 1), lambda i, k: (i, 0)),
            scratch_shapes=[pltpu.VMEM((tb, HIDDEN), jnp.float32)],   # fc1 accumulator
        ),
        compiler_params=pltpu.CompilerParams(
            dimension_semantics=("parallel", "arbitrary"),
            vmem_limit_bytes=vmem_limit,
        ),
    )(x, w1, b1, w2, b2)

    return out


def init_params(key, input_dim):
    """Deterministic init matching nn.init.uniform_(-c, c), c = sqrt(1/input_dim)."""
    c = float(np.sqrt(1.0 / input_dim))
    k1, k2, k3, k4 = jax.random.split(key, 4)
    # torch stores fc1.weight as (512, D); we keep the transposed (D, 512)
    # layout so the kernel does plain x @ W1 — same math as y = x @ W^T + b.
    w1 = jax.random.uniform(k1, (input_dim, HIDDEN), jnp.float32, -c, c)
    b1 = jax.random.uniform(k2, (1, HIDDEN), jnp.float32, -c, c)
    w2 = jax.random.uniform(k3, (1, HIDDEN), jnp.float32, -c, c)   # = fc2.weight
    b2 = jax.random.uniform(k4, (1, 1), jnp.float32, -c, c)
    return w1, b1, w2, b2


def reference_forward(x, w1, b1, w2, b2):
    """Pure-JAX reference with the same math as the PyTorch forward."""
    h = jnp.maximum(jnp.dot(x, w1, preferred_element_type=jnp.float32) + b1, 0.0)
    return jnp.sum(h * w2, axis=-1, keepdims=True) + b2


if __name__ == "__main__":
    key = jax.random.PRNGKey(0)
    k_x, k_p, k_big, k_kd, k_kp, k_rd, k_rp = jax.random.split(key, 7)

    # 1) f32, tiny batch: single grid step.
    batch, input_dim = 8, 32
    x = jax.random.normal(k_x, (batch, input_dim), jnp.float32)
    w1, b1, w2, b2 = init_params(k_p, input_dim)
    out = jax.block_until_ready(value_network_forward(x, w1, b1, w2, b2))
    ref = reference_forward(x, w1, b1, w2, b2)
    np.testing.assert_allclose(np.asarray(out), np.asarray(ref), rtol=1e-4, atol=1e-4)
    assert out.shape == (batch, 1)

    # 2) f32, non-multiple batch: two balanced batch tiles + masked ragged tail
    #    (no wrapper-side pad, no crop).
    big_b = 300
    xb = jax.random.normal(k_big, (big_b, input_dim), jnp.float32)
    out_b = jax.block_until_ready(value_network_forward(xb, w1, b1, w2, b2))
    ref_b = reference_forward(xb, w1, b1, w2, b2)
    np.testing.assert_allclose(np.asarray(out_b), np.asarray(ref_b), rtol=1e-4, atol=1e-4)
    assert out_b.shape == (big_b, 1)

    # 3) Producer-provided bf16 activations/weights (true 2 B/elem in HBM,
    #    no wrapper cast): compare against a bf16-fed reference.
    x_bf, w1_bf = xb.astype(jnp.bfloat16), w1.astype(jnp.bfloat16)
    out_bf = jax.block_until_ready(value_network_forward(x_bf, w1_bf, b1, w2, b2))
    ref_bf = reference_forward(x_bf, w1_bf, b1, w2, b2)
    np.testing.assert_allclose(np.asarray(out_bf), np.asarray(ref_bf), rtol=1e-2, atol=1e-2)

    # 4) f32 inputs, in-kernel bf16 MXU operands (v5e MXU-rate path).
    out_mx = jax.block_until_ready(
        value_network_forward(xb, w1, b1, w2, b2, mxu_dtype=jnp.bfloat16))
    np.testing.assert_allclose(np.asarray(out_mx), np.asarray(ref_bf), rtol=1e-2, atol=1e-2)

    # 5) K-tiled path (forced small k_tile), D a multiple of the tile.
    kb, kd = 16, 384
    xk = jax.random.normal(k_kd, (kb, kd), jnp.float32)
    w1k, b1k, w2k, b2k = init_params(k_kp, kd)
    out_k = jax.block_until_ready(
        value_network_forward(xk, w1k, b1k, w2k, b2k, k_tile=128))
    ref_k = reference_forward(xk, w1k, b1k, w2k, b2k)
    np.testing.assert_allclose(np.asarray(out_k), np.asarray(ref_k), rtol=1e-3, atol=1e-3)

    # 6) K-tiled path with a ragged final K tile (exercises in-kernel masking).
    rb, rd = 16, 200
    xr = jax.random.normal(k_rd, (rb, rd), jnp.float32)
    w1r, b1r, w2r, b2r = init_params(k_rp, rd)
    out_r = jax.block_until_ready(
        value_network_forward(xr, w1r, b1r, w2r, b2r, k_tile=128))
    ref_r = reference_forward(xr, w1r, b1r, w2r, b2r)
    np.testing.assert_allclose(np.asarray(out_r), np.asarray(ref_r), rtol=1e-3, atol=1e-3)

    print("KERNEL_OK")
</pallas_src>

<mosaic_0001>
module attributes {stable_mosaic.version = 11 : i64} {
  func.func @_value_net_kernel(%arg0: i32, %arg1: i32, %arg2: memref<8x32xf32, #tpu.memory_space<vmem>>, %arg3: memref<32x512xf32, #tpu.memory_space<vmem>>, %arg4: memref<1x512xf32, #tpu.memory_space<vmem>>, %arg5: memref<1x512xf32, #tpu.memory_space<vmem>>, %arg6: memref<1x1xf32, #tpu.memory_space<smem>>, %arg7: memref<8x1xf32, #tpu.memory_space<vmem>>, %arg8: memref<8x512xf32, #tpu.memory_space<vmem>>) attributes {dimension_semantics = [#tpu.dimension_semantics<parallel>, #tpu.dimension_semantics<arbitrary>], iteration_bounds = array<i64: 1, 1>, scalar_prefetch = 0 : i64, scratch_operands = 1 : i64, tpu.core_type = #tpu.core_type<tc>, window_params = [{transform_indices = @transform_0, window_bounds = array<i64: 8, 32>}, {transform_indices = @transform_1, window_bounds = array<i64: 32, 512>}, {pipeline_mode = #tpu.pipeline_mode<synchronous>, transform_indices = @transform_2, window_bounds = array<i64: 1, 512>}, {pipeline_mode = #tpu.pipeline_mode<synchronous>, transform_indices = @transform_3, window_bounds = array<i64: 1, 512>}, {transform_indices = @transform_4, window_bounds = array<i64: 1, 1>}, {transform_indices = @transform_5, window_bounds = array<i64: 8, 1>}]} {
    %c0_i32 = arith.constant 0 : i32
    %0 = arith.cmpi eq, %arg1, %c0_i32 : i32
    %1 = arith.extui %0 : i1 to i32
    %c0_i32_0 = arith.constant 0 : i32
    %2 = arith.cmpi ne, %1, %c0_i32_0 : i32
    scf.if %2 {
      %cst_10 = arith.constant 0.000000e+00 : f32
      %12 = vector.broadcast %cst_10 : f32 to vector<8x512xf32>
      %c0_11 = arith.constant 0 : index
      %c0_12 = arith.constant 0 : index
      %13 = vector.load %arg8[%c0_11, %c0_12] : memref<8x512xf32, #tpu.memory_space<vmem>>, vector<8x512xf32>
      tpu.vector_store %arg8[%c0_11, %c0_12], %12 {strides = array<i32>} : memref<8x512xf32, #tpu.memory_space<vmem>>, vector<8x512xf32>,
    } else {
    }
    %c0 = arith.constant 0 : index
    %c0_1 = arith.constant 0 : index
    %3 = vector.load %arg2[%c0, %c0_1] : memref<8x32xf32, #tpu.memory_space<vmem>>, vector<8x32xf32>
    %c0_2 = arith.constant 0 : index
    %c0_3 = arith.constant 0 : index
    %4 = vector.load %arg3[%c0_2, %c0_3] : memref<32x512xf32, #tpu.memory_space<vmem>>, vector<32x512xf32>
    %c0_4 = arith.constant 0 : index
    %c0_5 = arith.constant 0 : index
    %5 = vector.load %arg8[%c0_4, %c0_5] : memref<8x512xf32, #tpu.memory_space<vmem>>, vector<8x512xf32>
    %cst = arith.constant dense<0.000000e+00> : vector<8x512xf32>
    %6 = tpu.matmul %3, %4, %cst {dimension_numbers = #tpu.dot_dimension_numbers<[1], [0], [0], [1], [0, 0, 1, 1], [], []>} : vector<8x32xf32>, vector<32x512xf32>, vector<8x512xf32> -> vector<8x512xf32>
    %7 = arith.addf %5, %6 : vector<8x512xf32>
    %c0_6 = arith.constant 0 : index
    %c0_7 = arith.constant 0 : index
    %8 = vector.load %arg8[%c0_6, %c0_7] : memref<8x512xf32, #tpu.memory_space<vmem>>, vector<8x512xf32>
    tpu.vector_store %arg8[%c0_6, %c0_7], %7 {strides = array<i32>} : memref<8x512xf32, #tpu.memory_space<vmem>>, vector<8x512xf32>,
    %c0_i32_8 = arith.constant 0 : i32
    %9 = arith.cmpi eq, %arg1, %c0_i32_8 : i32
    %10 = arith.extui %9 : i1 to i32
    %c0_i32_9 = arith.constant 0 : i32
    %11 = arith.cmpi ne, %10, %c0_i32_9 : i32
    scf.if %11 {
      %c0_10 = arith.constant 0 : index
      %c0_11 = arith.constant 0 : index
      %12 = vector.load %arg8[%c0_10, %c0_11] : memref<8x512xf32, #tpu.memory_space<vmem>>, vector<8x512xf32>
      %c0_12 = arith.constant 0 : index
      %c0_13 = arith.constant 0 : index
      %13 = vector.load %arg4[%c0_12, %c0_13] : memref<1x512xf32, #tpu.memory_space<vmem>>, vector<1x512xf32>
      %14 = vector.broadcast %13 : vector<1x512xf32> to vector<8x512xf32>
      %15 = arith.addf %12, %14 : vector<8x512xf32>
      %cst_14 = arith.constant 0.000000e+00 : f32
      %16 = vector.broadcast %cst_14 : f32 to vector<8x512xf32>
      %17 = arith.maximumf %15, %16 : vector<8x512xf32>
      %c0_15 = arith.constant 0 : index
      %c0_16 = arith.constant 0 : index
      %18 = vector.load %arg5[%c0_15, %c0_16] : memref<1x512xf32, #tpu.memory_space<vmem>>, vector<1x512xf32>
      %19 = vector.broadcast %18 : vector<1x512xf32> to vector<8x512xf32>
      %20 = arith.mulf %17, %19 : vector<8x512xf32>
      %cst_17 = arith.constant dense<0.000000e+00> : vector<8xf32>
      %21 = vector.multi_reduction <add>, %20, %cst_17 [1] : vector<8x512xf32> to vector<8xf32>
      %22 = vector.shape_cast %21 : vector<8xf32> to vector<8x1xf32>
      %c0_18 = arith.constant 0 : index
      %c0_19 = arith.constant 0 : index
      %23 = memref.load %arg6[%c0_18, %c0_19] : memref<1x1xf32, #tpu.memory_space<smem>>
      %24 = vector.broadcast %23 : f32 to vector<8x1xf32>
      %25 = arith.addf %22, %24 : vector<8x1xf32>
      %c0_20 = arith.constant 0 : index
      %c0_21 = arith.constant 0 : index
      %26 = vector.load %arg7[%c0_20, %c0_21] : memref<8x1xf32, #tpu.memory_space<vmem>>, vector<8x1xf32>
      tpu.vector_store %arg7[%c0_20, %c0_21], %25 {strides = array<i32>} : memref<8x1xf32, #tpu.memory_space<vmem>>, vector<8x1xf32>,
    } else {
    }
    return
  }
  func.func @transform_0(%arg0: i32, %arg1: i32) -> (i32, i32) {
    %c0_i32 = arith.constant 0 : i32
    return %arg0, %arg1 : i32, i32
  }
  func.func @transform_1(%arg0: i32, %arg1: i32) -> (i32, i32) {
    %c0_i32 = arith.constant 0 : i32
    %c0_i32_0 = arith.constant 0 : i32
    return %arg1, %c0_i32 : i32, i32
  }
  func.func @transform_2(%arg0: i32, %arg1: i32) -> (i32, i32) {
    %c0_i32 = arith.constant 0 : i32
    %c0_i32_0 = arith.constant 0 : i32
    %c0_i32_1 = arith.constant 0 : i32
    return %c0_i32, %c0_i32_0 : i32, i32
  }
  func.func @transform_3(%arg0: i32, %arg1: i32) -> (i32, i32) {
    %c0_i32 = arith.constant 0 : i32
    %c0_i32_0 = arith.constant 0 : i32
    %c0_i32_1 = arith.constant 0 : i32
    return %c0_i32, %c0_i32_0 : i32, i32
  }
  func.func @transform_4(%arg0: i32, %arg1: i32) -> (i32, i32) {
    %c0_i32 = arith.constant 0 : i32
    %c0_i32_0 = arith.constant 0 : i32
    %c0_i32_1 = arith.constant 0 : i32
    return %c0_i32, %c0_i32_0 : i32, i32
  }
  func.func @transform_5(%arg0: i32, %arg1: i32) -> (i32, i32) {
    %c0_i32 = arith.constant 0 : i32
    %c0_i32_0 = arith.constant 0 : i32
    return %arg0, %c0_i32 : i32, i32
  }
}

</mosaic_0001>

<llo_original>
// kernel: tpu_custom_call.1
$region0: #{tpu_custom_call.1}
  #allocation0 [shape = 'u32[]', space=smem, size = 0x4, offset = 0x4, fixed_abs, tag = 'smem constant byte address 0x4 - core index']
  #allocation1 [shape = 'u32[72,128]{1,0:T(1,128)}', space=vmem, size = 0x9000, scoped, tag = 'internal scratch']
  #allocation2 [shape = 'f32[8,512]{1,0:T(8,128)}', space=vmem, size = 0x4000, scoped, tag = 'scratch operand']
  #allocation3 [shape = 'f32[1,1]{1,0:T(1,128)S(6)}', space=smem, size = 0x200, scoped, tag = 'scoped memory for tpu_custom_call.1']
  %s0 = inlined_call_operand.hbm [shape: f32[8,32], index: 0, kind: input, shape index: {}]
  %s1 = inlined_call_operand.hbm [shape: f32[32,512], index: 1, kind: input, shape index: {}]
  %s2 = inlined_call_operand.hbm [shape: f32[1,512], index: 2, kind: input, shape index: {}]
  %s3 = inlined_call_operand.vmem [shape: f32[1,512], index: 3, kind: input, shape index: {}]
  %s4 = inlined_call_operand.<no memory space> [shape: f32[1,1], index: 4, kind: input, shape index: {}]
  %s5 = inlined_call_operand.vmem [shape: f32[8,1], index: 5, kind: output, shape index: {}]
  %s6 = sld [smem:[#allocation0]]
  $region50: #{tpu_custom_call.1} parent=0
    _
  %s8 = ssub.s32 1, %s6
  %s9 = scalar_select 0, %s8, %s6
  %10 = sst [smem:[#allocation3]] %s4
  $region1: #{tpu_custom_call.1} parent=0
    #allocation4 [shape = 'u8[4096]{0}', space=vmem, size = 0x1000, scoped, tag = 'input window, operand 0, single buffered']
    #allocation5 [shape = 's32[1]{0}', space=sflag, size = 0x4, scoped, tag = 'scoped memory for tpu_custom_call.1']
    #allocation6 [shape = 'u8[65536]{0}', space=vmem, size = 0x10000, scoped, tag = 'input window, operand 1, single buffered']
    #allocation7 [shape = 's32[1]{0}', space=sflag, size = 0x4, scoped, tag = 'scoped memory for tpu_custom_call.1']
    #allocation8 [shape = 'u8[2048]{0}', space=vmem, size = 0x800, scoped, tag = 'input window, operand 2, single buffered']
    %11 = vsyncpa [#allocation5], 0
    %12 = vsyncpa [#allocation7], 0
    // Predicated region
    $region2: #{tpu_custom_call.1} parent=1 // pred_check
      _
    $region3: #{tpu_custom_call.1} parent=1 // pred_check_branch
      %14 = sbr.rel (0) target = $region5
    $region4: #{tpu_custom_call.1} parent=1 // pred_region
      %16 = vsyncadd [#allocation5], 0
      %s18 = sshll.u32 %s0, 4
      %s19 = int_to_ptr.hbm [resolvable:$true] %s18
      %s20 = sshll.u32 [#allocation4], 4
      %s21 = int_to_ptr.vmem [resolvable:$true] %s20
      %23 = dma.hbm_to_vmem [thread:$0]  %s19, 128, %s21, [#allocation5]
    $region5: #{tpu_custom_call.1} parent=1 // pred_fallthru
      _
    // Predicated region
    $region6: #{tpu_custom_call.1} parent=1 // pred_check
      _
    $region7: #{tpu_custom_call.1} parent=1 // pred_check_branch
      %25 = sbr.rel (0) target = $region9
    $region8: #{tpu_custom_call.1} parent=1 // pred_region
      %27 = vsyncadd [#allocation7], 0
      %s28 = sshll.u32 %s1, 4
      %s29 = int_to_ptr.hbm [resolvable:$true] %s28
      %s30 = sshll.u32 [#allocation6], 4
      %s31 = int_to_ptr.vmem [resolvable:$true] %s30
      %36 = dma.hbm_to_vmem [thread:$0]  %s29, 2048, %s31, [#allocation7], 512, 512, 32
    $region9: #{tpu_custom_call.1} parent=1 // pred_fallthru
      _
    // Predicated region
    $region10: #{tpu_custom_call.1} parent=1 // pred_check
      _
    $region11: #{tpu_custom_call.1} parent=1 // pred_check_branch
      %38 = sbr.rel (0) target = $region13
    $region12: #{tpu_custom_call.1} parent=1 // pred_region
      %40 = vsyncadd [#allocation7], 0
      %s42 = sshll.u32 %s2, 4
      %s43 = int_to_ptr.hbm [resolvable:$true] %s42
      %s44 = sshll.u32 [#allocation8], 4
      %s45 = int_to_ptr.vmem [resolvable:$true] %s44
      %47 = dma.hbm_to_vmem [thread:$0]  %s43, 64, %s45, [#allocation7]
    $region13: #{tpu_custom_call.1} parent=1 // pred_fallthru
      _
    // Predicated region
    $region14: #{tpu_custom_call.1} parent=1 // pred_check
      _
    $region15: #{tpu_custom_call.1} parent=1 // pred_check_branch
      %49 = sbr.rel (0) target = $region17
    $region16: #{tpu_custom_call.1} parent=1 // pred_region
      _
    $region17: #{tpu_custom_call.1} parent=1 // pred_fallthru
      _
    // Predicated region
    $region18: #{tpu_custom_call.1} parent=1 // pred_check
      _
    $region19: #{tpu_custom_call.1} parent=1 // pred_check_branch
      %51 = sbr.rel (0) target = $region21
    $region20: #{tpu_custom_call.1} parent=1 // pred_region
      _
    $region21: #{tpu_custom_call.1} parent=1 // pred_fallthru
      _
    // Predicated region
    $region22: #{tpu_custom_call.1} parent=1 // pred_check
      _
    $region23: #{tpu_custom_call.1} parent=1 // pred_check_branch
      %53 = sbr.rel (0) target = $region25
    $region24: #{tpu_custom_call.1} parent=1 // pred_region
      %55 = dma.done [#allocation5], 128
    $region25: #{tpu_custom_call.1} parent=1 // pred_fallthru
      _
    // Predicated region
    $region26: #{tpu_custom_call.1} parent=1 // pred_check
      _
    $region27: #{tpu_custom_call.1} parent=1 // pred_check_branch
      %57 = sbr.rel (0) target = $region29
    $region28: #{tpu_custom_call.1} parent=1 // pred_region
      %59 = dma.done [#allocation7], 2048
    $region29: #{tpu_custom_call.1} parent=1 // pred_fallthru
      _
    // Predicated region
    $region30: #{tpu_custom_call.1} parent=1 // pred_check
      _
    $region31: #{tpu_custom_call.1} parent=1 // pred_check_branch
      %61 = sbr.rel (0) target = $region33
    $region32: #{tpu_custom_call.1} parent=1 // pred_region
      %63 = dma.done [#allocation7], 64
    $region33: #{tpu_custom_call.1} parent=1 // pred_fallthru
      _
    %p64 = scmp.eq.s32.totalorder 0, 0
    // Predicated region
    $region34: #{tpu_custom_call.1} parent=1 // pred_check
      %p65 = pneg %p64
    $region35: #{tpu_custom_call.1} parent=1 // pred_check_branch
      %67 = sbr.rel (%p65) target = $region37
    $region36: #{tpu_custom_call.1} parent=1 // pred_region
      %68 = vst [vmem:[#allocation2] sm:$0xff] 0.0
      %69 = vst [vmem:[#allocation2 + $0x8] sm:$0xff] 0.0
      %70 = vst [vmem:[#allocation2 + $0x10] sm:$0xff] 0.0
      %71 = vst [vmem:[#allocation2 + $0x18] sm:$0xff] 0.0
    $region37: #{tpu_custom_call.1} parent=1 // pred_fallthru
      _
    %v72 = vld [vmem:[#allocation4] sm:$0xff]
    %v73 = vld [vmem:[#allocation6] sm:$0xff]
    %v74 = vld [vmem:[#allocation6 + $0x8] sm:$0xff]
    %v75 = vld [vmem:[#allocation6 + $0x10] sm:$0xff]
    %v76 = vld [vmem:[#allocation6 + $0x18] sm:$0xff]
    %v77 = vld [vmem:[#allocation6 + $0x20] sm:$0xff]
    %v78 = vld [vmem:[#allocation6 + $0x28] sm:$0xff]
    %v79 = vld [vmem:[#allocation6 + $0x30] sm:$0xff]
    %v80 = vld [vmem:[#allocation6 + $0x38] sm:$0xff]
    %v81 = vld [vmem:[#allocation6 + $0x40] sm:$0xff]
    %v82 = vld [vmem:[#allocation6 + $0x48] sm:$0xff]
    %v83 = vld [vmem:[#allocation6 + $0x50] sm:$0xff]
    %v84 = vld [vmem:[#allocation6 + $0x58] sm:$0xff]
    %v85 = vld [vmem:[#allocation6 + $0x60] sm:$0xff]
    %v86 = vld [vmem:[#allocation6 + $0x68] sm:$0xff]
    %v87 = vld [vmem:[#allocation6 + $0x70] sm:$0xff]
    %v88 = vld [vmem:[#allocation6 + $0x78] sm:$0xff]
    %v89 = vld [vmem:[#allocation2] sm:$0xff]
    %v90 = vld [vmem:[#allocation2 + $0x8] sm:$0xff]
    %v91 = vld [vmem:[#allocation2 + $0x10] sm:$0xff]
    %v92 = vld [vmem:[#allocation2 + $0x18] sm:$0xff]
    %vm93 = vcmask 261120
    %v95 = vsel %vm93, %v72, 0
    %97 = vmatpush.msra.mxu0 0.0
    %98 = vmatpush.msra.mxu0 0.0
    %99 = vmatpush.msra.mxu0 0.0
    %100 = vmatpush.msra.mxu0 0.0
    %101 = vmatpush.msra.mxu0 0.0
    %102 = vmatpush.msra.mxu0 0.0
    %103 = vmatpush.msra.mxu0 0.0
    %104 = vmatpush.msra.mxu0 0.0
    %105 = vmatpush.msra.mxu0 0.0
    %106 = vmatpush.msra.mxu0 0.0
    %107 = vmatpush.msra.mxu0 0.0
    %108 = vmatpush.msra.mxu0 0.0
    %109 = vmatpush.msra.mxu0 %v85
    %110 = vmatpush.msra.mxu0 %v81
    %111 = vmatpush.msra.mxu0 %v77
    %112 = vmatpush.msra.mxu0 %v73
    %113 = vmatmul.f32.gmra.mxu0 %v95
    %v114 = vpop.f32.mrf.mxu0
    %v115 = vadd.f32 0.0, %v114
    %116 = vdwg.mxu0
    %117 = vmatpush.msra.mxu0 0.0
    %118 = vmatpush.msra.mxu0 0.0
    %119 = vmatpush.msra.mxu0 0.0
    %120 = vmatpush.msra.mxu0 0.0
    %121 = vmatpush.msra.mxu0 0.0
    %122 = vmatpush.msra.mxu0 0.0
    %123 = vmatpush.msra.mxu0 0.0
    %124 = vmatpush.msra.mxu0 0.0
    %125 = vmatpush.msra.mxu0 0.0
    %126 = vmatpush.msra.mxu0 0.0
    %127 = vmatpush.msra.mxu0 0.0
    %128 = vmatpush.msra.mxu0 0.0
    %129 = vmatpush.msra.mxu0 %v86
    %130 = vmatpush.msra.mxu0 %v82
    %131 = vmatpush.msra.mxu0 %v78
    %132 = vmatpush.msra.mxu0 %v74
    %133 = vmatmul.f32.gmra.mxu0 %v95
    %v134 = vpop.f32.mrf.mxu0
    %v135 = vadd.f32 0.0, %v134
    %136 = vdwg.mxu0
    %137 = vmatpush.msra.mxu0 0.0
    %138 = vmatpush.msra.mxu0 0.0
    %139 = vmatpush.msra.mxu0 0.0
    %140 = vmatpush.msra.mxu0 0.0
    %141 = vmatpush.msra.mxu0 0.0
    %142 = vmatpush.msra.mxu0 0.0
    %143 = vmatpush.msra.mxu0 0.0
    %144 = vmatpush.msra.mxu0 0.0
    %145 = vmatpush.msra.mxu0 0.0
    %146 = vmatpush.msra.mxu0 0.0
    %147 = vmatpush.msra.mxu0 0.0
    %148 = vmatpush.msra.mxu0 0.0
    %149 = vmatpush.msra.mxu0 %v87
    %150 = vmatpush.msra.mxu0 %v83
    %151 = vmatpush.msra.mxu0 %v79
    %152 = vmatpush.msra.mxu0 %v75
    %153 = vmatmul.f32.gmra.mxu0 %v95
    %v154 = vpop.f32.mrf.mxu0
    %v155 = vadd.f32 0.0, %v154
    %156 = vdwg.mxu0
    %157 = vmatpush.msra.mxu0 0.0
    %158 = vmatpush.msra.mxu0 0.0
    %159 = vmatpush.msra.mxu0 0.0
    %160 = vmatpush.msra.mxu0 0.0
    %161 = vmatpush.msra.mxu0 0.0
    %162 = vmatpush.msra.mxu0 0.0
    %163 = vmatpush.msra.mxu0 0.0
    %164 = vmatpush.msra.mxu0 0.0
    %165 = vmatpush.msra.mxu0 0.0
    %166 = vmatpush.msra.mxu0 0.0
    %167 = vmatpush.msra.mxu0 0.0
    %168 = vmatpush.msra.mxu0 0.0
    %169 = vmatpush.msra.mxu0 %v88
    %170 = vmatpush.msra.mxu0 %v84
    %171 = vmatpush.msra.mxu0 %v80
    %172 = vmatpush.msra.mxu0 %v76
    %173 = vmatmul.f32.gmra.mxu0 %v95
    %v174 = vpop.f32.mrf.mxu0
    %v175 = vadd.f32 0.0, %v174
    %176 = vdwg.mxu0
    %v177 = vadd.f32 %v89, %v115
    %v178 = vadd.f32 %v90, %v135
    %v179 = vadd.f32 %v91, %v155
    %v180 = vadd.f32 %v92, %v175
    %181 = vst [vmem:[#allocation2] sm:$0xff] %v177
    %182 = vst [vmem:[#allocation2 + $0x8] sm:$0xff] %v178
    %183 = vst [vmem:[#allocation2 + $0x10] sm:$0xff] %v179
    %184 = vst [vmem:[#allocation2 + $0x18] sm:$0xff] %v180
    // Predicated region
    $region38: #{tpu_custom_call.1} parent=1 // pred_check
      %p185 = pneg %p64
    $region39: #{tpu_custom_call.1} parent=1 // pred_check_branch
      %187 = sbr.rel (%p185) target = $region41
    $region40: #{tpu_custom_call.1} parent=1 // pred_region
      %v188 = vld [vmem:[#allocation2] sm:$0xff]
      %v189 = vld [vmem:[#allocation2 + $0x8] sm:$0xff]
      %v190 = vld [vmem:[#allocation2 + $0x10] sm:$0xff]
      %v191 = vld [vmem:[#allocation2 + $0x18] sm:$0xff]
      %v192 = vld [vmem:[#allocation8] sm:$0xf]
      %v194 = vperm.slane %v192, 0
      %v195 = vperm.slane %v192, 1
      %v196 = vperm.slane %v192, 2
      %v197 = vperm.slane %v192, 3
      %v202 = vadd.f32 %v188, %v194
      %v203 = vadd.f32 %v189, %v195
      %v204 = vadd.f32 %v190, %v196
      %v205 = vadd.f32 %v191, %v197
      %v206 = vmax.f32 %v202, 0.0
      %v207 = vmax.f32 %v203, 0.0
      %v208 = vmax.f32 %v204, 0.0
      %v209 = vmax.f32 %v205, 0.0
      %v210 = vld [vmem:[%s3] sm:$0xf]
      %v212 = vperm.slane %v210, 0
      %v213 = vperm.slane %v210, 1
      %v214 = vperm.slane %v210, 2
      %v215 = vperm.slane %v210, 3
      %v220 = vmul.f32 %v206, %v212
      %v221 = vmul.f32 %v207, %v213
      %v222 = vmul.f32 %v208, %v214
      %v223 = vmul.f32 %v209, %v215
      %v224 = vadd.f32 %v220, %v221
      %v225 = vadd.f32 %v224, %v222
      %v226 = vadd.f32 %v225, %v223
      %227 = vadd.xlane.f32.xlu0 %v226
      %v228 = vpop.xlane.xlu0 %227
      %s229 = sld [smem:[#allocation3]]
      %v230 = vstv %s229
      %v231 = vadd.f32 %v228, %v230
      %vm232 = vcmask 7168
      %233 = vst.msk [vmem:[%s5] sm:$0xff] %vm232, %v231
    $region41: #{tpu_custom_call.1} parent=1 // pred_fallthru
      _
    // Predicated region
    $region42: #{tpu_custom_call.1} parent=1 // pred_check
      _
    $region43: #{tpu_custom_call.1} parent=1 // pred_check_branch
      %235 = sbr.rel (0) target = $region45
    $region44: #{tpu_custom_call.1} parent=1 // pred_region
      _
    $region45: #{tpu_custom_call.1} parent=1 // pred_fallthru
      _
    // Predicated region
    $region46: #{tpu_custom_call.1} parent=1 // pred_check
      _
    $region47: #{tpu_custom_call.1} parent=1 // pred_check_branch
      %237 = sbr.rel (0) target = $region49
    $region48: #{tpu_custom_call.1} parent=1 // pred_region
      _
    $region49: #{tpu_custom_call.1} parent=1 // pred_fallthru
      _
    %238 = vsyncpa [#allocation5], 1
    %239 = vsyncpa [#allocation7], 1

</llo_original>
